<compile_context>
chip_gen: v6e
topology: v6e:2x2x1
jax: 0.10.0
libtpu: 0.0.40
codegen_flags: <defaults>
</compile_context>

<pallas_src>
import jax
import jax.numpy as jnp
from jax import lax
from jax.experimental import pallas as pl
from jax.experimental.pallas import tpu as pltpu

IN_CHANNELS = 4
L_IN = 4               # forced by fc1 in-features: 192 = 64 * (L_IN - 1)
K = 2                  # conv kernel size
L_OUT = L_IN - K + 1   # = 3
C_OUT = 64
FLAT = C_OUT * L_OUT   # 192
H1 = 50
CL = IN_CHANNELS * L_IN  # 16


def conv1dnet_kernel(xf_ref, wce_ref, bce_ref, w1t_ref, b1_ref, w2_ref, b2_ref, o_ref):
    """One batch tile; weights stay VMEM-resident across grid steps.

    xf_ref  : (TB, 16)   raw input, flattened NCL (c*L + l)   [bf16 or f32]
    wce_ref : (16, 192)  zero-embedded conv weight (conv == one matmul)
    bce_ref : (1, 192)   conv bias repeated per time step     [f32]
    w1t_ref : (192, 50)  fc1 weight transposed
    b1_ref  : (1, 50)    fc1 bias                              [f32]
    w2_ref  : (1, 50)    fc2 weight row                        [f32]
    b2_ref  : (1, 1)     fc2 bias                              [f32]
    o_ref   : (1, TB)    lane-dense output block
    """
    # Conv1d + channel-major flatten: one MXU matmul, f32 accumulation.
    conv = jnp.dot(xf_ref[...], wce_ref[...], preferred_element_type=jnp.float32)
    conv = jnp.maximum(conv + bce_ref[...], 0.0)                      # (TB, 192) f32

    # fc1 + ReLU (operands in the matmul dtype, accumulate f32; bias/ReLU in f32).
    h1 = jnp.dot(conv.astype(w1t_ref.dtype), w1t_ref[...],
                 preferred_element_type=jnp.float32)
    h1 = jnp.maximum(h1 + b1_ref[...], 0.0)                           # (TB, 50) f32

    # fc2 as a lane-dense (1, TB) MXU op: (1,50) . (TB,50)^T.
    out = lax.dot_general(w2_ref[...], h1, (((1,), (1,)), ((), ())),
                          preferred_element_type=jnp.float32) + b2_ref[...]
    o_ref[...] = out.astype(o_ref.dtype)                              # (1, TB)


def _embed_conv_weight(wc):
    """(64, C, K) conv weight -> (C*L, 64*L_OUT) matmul weight.

    W_emb[c*L + (t+k), o*L_OUT + t] = wc[o, c, k]; PyTorch Flatten order is
    channel-major (idx = o*L_OUT + t), so no activation transpose is needed.
    """
    w = jnp.zeros((CL, FLAT), jnp.float32)
    rows_c = jnp.arange(IN_CHANNELS) * L_IN
    cols_o = jnp.arange(C_OUT) * L_OUT
    for t in range(L_OUT):
        for k in range(K):
            w = w.at[(rows_c + t + k)[:, None], (cols_o + t)[None, :]].set(wc[:, :, k].T)
    return w


def prepare_params(params, *, matmul_dtype=jnp.bfloat16):
    """One-time weight prep (embedding / transposes / casts).

    Call once per parameter set and reuse; keeps the scatter/transpose work
    out of the per-call forward path. matmul_dtype=jnp.float32 gives exact
    PyTorch parity; bf16 is MXU-native and faster.
    """
    wc, bc, w1, b1, w2, b2 = params
    wce = _embed_conv_weight(wc).astype(matmul_dtype)            # (16, 192)
    bce = jnp.repeat(bc, L_OUT).reshape(1, FLAT).astype(jnp.float32)
    w1t = w1.T.astype(matmul_dtype)                              # (192, 50)
    b1r = b1.reshape(1, H1).astype(jnp.float32)
    w2r = w2.reshape(1, H1).astype(jnp.float32)
    b2r = b2.reshape(1, 1).astype(jnp.float32)
    return (wce, bce, w1t, b1r, w2r, b2r)


def _pick_tb(B, tb):
    """Sublane-aligned batch tile; cap at ~B/2 so v7x's 2 TCs both get steps."""
    if B <= 16:
        return max(8, ((B + 7) // 8) * 8)
    cap = max(8, (((B + 1) // 2 + 7) // 8) * 8)
    return max(8, (min(tb, cap) // 8) * 8)


def conv1dnet_forward(x, prepped, *, tb=2048):
    """x: (B, C, L) float32, PyTorch NCL layout. prepped: prepare_params(...)."""
    wce, bce, w1t, b1r, w2r, b2r = prepped
    B, C, L = x.shape
    assert C == IN_CHANNELS and L == L_IN
    mm_dtype = wce.dtype
    item = jnp.dtype(mm_dtype).itemsize

    xf = x.reshape(B, CL).astype(mm_dtype)       # flatten NCL: idx = c*L + l
    TB = _pick_tb(B, tb)
    n_blk = (B + TB - 1) // TB
    B_pad = n_blk * TB
    if B_pad != B:
        xf = jnp.pad(xf, ((0, B_pad - B), (0, 0)))

    const = lambda i: (0, 0)                     # weights: resident, no re-DMA

    # Advisory cost estimate for XLA scheduling around the custom call.
    flops = 2 * B_pad * (CL * FLAT + FLAT * H1 + H1)
    bytes_acc = (B_pad * CL * item + B_pad * 4
                 + (CL * FLAT + FLAT * H1) * item + 4 * (FLAT + 2 * H1 + 1))

    # Per-step VMEM estimate (double-buffered in/out + f32 intermediates);
    # only raise the scoped limit when the default would be exceeded.
    vmem_est = TB * (2 * CL * item + 2 * 4 + (FLAT + H1) * 4) + 2 * item * (CL * FLAT + FLAT * H1)
    cp = dict(dimension_semantics=("parallel",))
    if vmem_est > 24 * 1024 * 1024:
        cp["vmem_limit_bytes"] = min(2 * vmem_est, 60 * 1024 * 1024)

    out = pl.pallas_call(
        conv1dnet_kernel,
        out_shape=jax.ShapeDtypeStruct((n_blk, 1, TB), jnp.float32),
        grid=(n_blk,),
        in_specs=[
            pl.BlockSpec((TB, CL), lambda i: (i, 0)),   # xf tile (streams per step)
            pl.BlockSpec((CL, FLAT), const),            # conv weight (embedded)
            pl.BlockSpec((1, FLAT), const),             # conv bias
            pl.BlockSpec((FLAT, H1), const),            # fc1 weight
            pl.BlockSpec((1, H1), const),               # fc1 bias
            pl.BlockSpec((1, H1), const),               # fc2 weight row
            pl.BlockSpec((1, 1), const),                # fc2 bias
        ],
        # leading dim squeezed -> kernel sees a lane-dense (1, TB) block
        out_specs=pl.BlockSpec((None, 1, TB), lambda i: (i, 0, 0)),
        compiler_params=pltpu.CompilerParams(**cp),
        cost_estimate=pl.CostEstimate(flops=flops, transcendentals=0,
                                      bytes_accessed=bytes_acc),
    )(xf, wce, bce, w1t, b1r, w2r, b2r)
    return out.reshape(B_pad, 1)[:B]


def reference_forward(x, params):
    """Plain-JAX reference reproducing PyTorch semantics exactly (f32)."""
    wc, bc, w1, b1, w2, b2 = params
    B, C, L = x.shape
    conv = jnp.stack(
        [jnp.einsum('bck,ock->bo', x[:, :, t:t + K], wc) + bc for t in range(L_OUT)],
        axis=-1)                                    # (B, 64, L_OUT)
    conv = jnp.maximum(conv, 0.0)
    flat = conv.reshape(B, FLAT)                    # channel-major flatten
    h1 = jnp.maximum(flat @ w1.T + b1, 0.0)
    return h1 @ w2.T + b2


def init_params(key):
    k = jax.random.split(key, 6)
    wc = jax.random.uniform(k[0], (C_OUT, IN_CHANNELS, K), jnp.float32, -0.3, 0.3)
    bc = jax.random.uniform(k[1], (C_OUT,), jnp.float32, -0.3, 0.3)
    w1 = jax.random.uniform(k[2], (H1, FLAT), jnp.float32, -0.07, 0.07)
    b1 = jax.random.uniform(k[3], (H1,), jnp.float32, -0.07, 0.07)
    w2 = jax.random.uniform(k[4], (1, H1), jnp.float32, -0.14, 0.14)
    b2 = jax.random.uniform(k[5], (1,), jnp.float32, -0.14, 0.14)
    return wc, bc, w1, b1, w2, b2


if __name__ == "__main__":
    key = jax.random.PRNGKey(0)
    kx, kx2, kp = jax.random.split(key, 3)
    params = init_params(kp)

    # One-time weight prep (hoisted out of the per-call path).
    prepped_f32 = prepare_params(params, matmul_dtype=jnp.float32)
    prepped_bf16 = prepare_params(params, matmul_dtype=jnp.bfloat16)

    fwd = jax.jit(conv1dnet_forward, static_argnames=("tb",))

    # Small test, f32 matmul path: exact parity with the PyTorch semantics.
    B = 2
    x = jax.random.normal(kx, (B, IN_CHANNELS, L_IN), jnp.float32)
    ref = reference_forward(x, params)
    out = jax.block_until_ready(fwd(x, prepped_f32))
    assert out.shape == (B, 1)
    assert jnp.allclose(out, ref, atol=1e-4, rtol=1e-4)

    # Multi-tile test, bf16 matmul operands / f32 accumulation (fast path).
    B2 = 4096
    x2 = jax.random.normal(kx2, (B2, IN_CHANNELS, L_IN), jnp.float32)
    ref2 = reference_forward(x2, params)
    out2 = jax.block_until_ready(fwd(x2, prepped_bf16, tb=2048))
    assert out2.shape == (B2, 1)
    assert jnp.allclose(out2, ref2, atol=3e-2, rtol=3e-2)

    print("KERNEL_OK")
</pallas_src>

<mosaic_0001>
module attributes {stable_mosaic.version = 11 : i64} {
  func.func @conv1dnet_kernel(%arg0: i32, %arg1: memref<8x16xf32, #tpu.memory_space<vmem>>, %arg2: memref<16x192xf32, #tpu.memory_space<vmem>>, %arg3: memref<1x192xf32, #tpu.memory_space<vmem>>, %arg4: memref<192x50xf32, #tpu.memory_space<vmem>>, %arg5: memref<1x50xf32, #tpu.memory_space<vmem>>, %arg6: memref<1x50xf32, #tpu.memory_space<vmem>>, %arg7: memref<1x1xf32, #tpu.memory_space<vmem>>, %arg8: memref<1x1x8xf32, #tpu.memory_space<vmem>>) attributes {dimension_semantics = [#tpu.dimension_semantics<parallel>], iteration_bounds = array<i64: 1>, scalar_prefetch = 0 : i64, scratch_operands = 0 : i64, tpu.core_type = #tpu.core_type<tc>, window_params = [{transform_indices = @transform_0, window_bounds = array<i64: 8, 16>}, {pipeline_mode = #tpu.pipeline_mode<synchronous>, transform_indices = @transform_1, window_bounds = array<i64: 16, 192>}, {pipeline_mode = #tpu.pipeline_mode<synchronous>, transform_indices = @transform_2, window_bounds = array<i64: 1, 192>}, {pipeline_mode = #tpu.pipeline_mode<synchronous>, transform_indices = @transform_3, window_bounds = array<i64: 192, 50>}, {pipeline_mode = #tpu.pipeline_mode<synchronous>, transform_indices = @transform_4, window_bounds = array<i64: 1, 50>}, {pipeline_mode = #tpu.pipeline_mode<synchronous>, transform_indices = @transform_5, window_bounds = array<i64: 1, 50>}, {pipeline_mode = #tpu.pipeline_mode<synchronous>, transform_indices = @transform_6, window_bounds = array<i64: 1, 1>}, {transform_indices = @transform_7, window_bounds = array<i64: 1, 1, 8>}]} {
    %c0 = arith.constant 0 : index
    %c0_0 = arith.constant 0 : index
    %0 = vector.load %arg1[%c0, %c0_0] : memref<8x16xf32, #tpu.memory_space<vmem>>, vector<8x16xf32>
    %c0_1 = arith.constant 0 : index
    %c0_2 = arith.constant 0 : index
    %1 = vector.load %arg2[%c0_1, %c0_2] : memref<16x192xf32, #tpu.memory_space<vmem>>, vector<16x192xf32>
    %cst = arith.constant dense<0.000000e+00> : vector<8x192xf32>
    %2 = tpu.matmul %0, %1, %cst {dimension_numbers = #tpu.dot_dimension_numbers<[1], [0], [0], [1], [0, 0, 1, 1], [], []>} : vector<8x16xf32>, vector<16x192xf32>, vector<8x192xf32> -> vector<8x192xf32>
    %c0_3 = arith.constant 0 : index
    %c0_4 = arith.constant 0 : index
    %3 = vector.load %arg3[%c0_3, %c0_4] : memref<1x192xf32, #tpu.memory_space<vmem>>, vector<1x192xf32>
    %4 = vector.broadcast %3 : vector<1x192xf32> to vector<8x192xf32>
    %5 = arith.addf %2, %4 : vector<8x192xf32>
    %cst_5 = arith.constant 0.000000e+00 : f32
    %6 = vector.broadcast %cst_5 : f32 to vector<8x192xf32>
    %7 = arith.maximumf %5, %6 : vector<8x192xf32>
    %c0_6 = arith.constant 0 : index
    %c0_7 = arith.constant 0 : index
    %8 = vector.load %arg4[%c0_6, %c0_7] : memref<192x50xf32, #tpu.memory_space<vmem>>, vector<192x50xf32>
    %cst_8 = arith.constant dense<0.000000e+00> : vector<8x50xf32>
    %9 = tpu.matmul %7, %8, %cst_8 {dimension_numbers = #tpu.dot_dimension_numbers<[1], [0], [0], [1], [0, 0, 1, 1], [], []>} : vector<8x192xf32>, vector<192x50xf32>, vector<8x50xf32> -> vector<8x50xf32>
    %c0_9 = arith.constant 0 : index
    %c0_10 = arith.constant 0 : index
    %10 = vector.load %arg5[%c0_9, %c0_10] : memref<1x50xf32, #tpu.memory_space<vmem>>, vector<1x50xf32>
    %11 = vector.broadcast %10 : vector<1x50xf32> to vector<8x50xf32>
    %12 = arith.addf %9, %11 : vector<8x50xf32>
    %cst_11 = arith.constant 0.000000e+00 : f32
    %13 = vector.broadcast %cst_11 : f32 to vector<8x50xf32>
    %14 = arith.maximumf %12, %13 : vector<8x50xf32>
    %c0_12 = arith.constant 0 : index
    %c0_13 = arith.constant 0 : index
    %15 = vector.load %arg6[%c0_12, %c0_13] : memref<1x50xf32, #tpu.memory_space<vmem>>, vector<1x50xf32>
    %cst_14 = arith.constant dense<0.000000e+00> : vector<1x8xf32>
    %16 = tpu.matmul %15, %14, %cst_14 {dimension_numbers = #tpu.dot_dimension_numbers<[1], [1], [0], [0], [0, 0, 1, 0], [], []>} : vector<1x50xf32>, vector<8x50xf32>, vector<1x8xf32> -> vector<1x8xf32>
    %c0_15 = arith.constant 0 : index
    %c0_16 = arith.constant 0 : index
    %17 = vector.load %arg7[%c0_15, %c0_16] : memref<1x1xf32, #tpu.memory_space<vmem>>, vector<1x1xf32>
    %18 = vector.broadcast %17 : vector<1x1xf32> to vector<1x8xf32>
    %19 = arith.addf %16, %18 : vector<1x8xf32>
    %c0_17 = arith.constant 0 : index
    %c0_18 = arith.constant 0 : index
    %c0_19 = arith.constant 0 : index
    %20 = vector.load %arg8[%c0_17, %c0_18, %c0_19] : memref<1x1x8xf32, #tpu.memory_space<vmem>>, vector<1x1x8xf32>
    %21 = vector.shape_cast %20 : vector<1x1x8xf32> to vector<1x8xf32>
    %22 = vector.shape_cast %19 : vector<1x8xf32> to vector<1x1x8xf32>
    tpu.vector_store %arg8[%c0_17, %c0_18, %c0_19], %22 {strides = array<i32>} : memref<1x1x8xf32, #tpu.memory_space<vmem>>, vector<1x1x8xf32>,
    return
  }
  func.func @transform_0(%arg0: i32) -> (i32, i32) {
    %c0_i32 = arith.constant 0 : i32
    %c0_i32_0 = arith.constant 0 : i32
    return %arg0, %c0_i32 : i32, i32
  }
  func.func @transform_1(%arg0: i32) -> (i32, i32) {
    %c0_i32 = arith.constant 0 : i32
    %c0_i32_0 = arith.constant 0 : i32
    %c0_i32_1 = arith.constant 0 : i32
    return %c0_i32, %c0_i32_0 : i32, i32
  }
  func.func @transform_2(%arg0: i32) -> (i32, i32) {
    %c0_i32 = arith.constant 0 : i32
    %c0_i32_0 = arith.constant 0 : i32
    %c0_i32_1 = arith.constant 0 : i32
    return %c0_i32, %c0_i32_0 : i32, i32
  }
  func.func @transform_3(%arg0: i32) -> (i32, i32) {
    %c0_i32 = arith.constant 0 : i32
    %c0_i32_0 = arith.constant 0 : i32
    %c0_i32_1 = arith.constant 0 : i32
    return %c0_i32, %c0_i32_0 : i32, i32
  }
  func.func @transform_4(%arg0: i32) -> (i32, i32) {
    %c0_i32 = arith.constant 0 : i32
    %c0_i32_0 = arith.constant 0 : i32
    %c0_i32_1 = arith.constant 0 : i32
    return %c0_i32, %c0_i32_0 : i32, i32
  }
  func.func @transform_5(%arg0: i32) -> (i32, i32) {
    %c0_i32 = arith.constant 0 : i32
    %c0_i32_0 = arith.constant 0 : i32
    %c0_i32_1 = arith.constant 0 : i32
    return %c0_i32, %c0_i32_0 : i32, i32
  }
  func.func @transform_6(%arg0: i32) -> (i32, i32) {
    %c0_i32 = arith.constant 0 : i32
    %c0_i32_0 = arith.constant 0 : i32
    %c0_i32_1 = arith.constant 0 : i32
    return %c0_i32, %c0_i32_0 : i32, i32
  }
  func.func @transform_7(%arg0: i32) -> (i32, i32, i32) {
    %c0_i32 = arith.constant 0 : i32
    %c0_i32_0 = arith.constant 0 : i32
    %c0_i32_1 = arith.constant 0 : i32
    return %arg0, %c0_i32, %c0_i32_0 : i32, i32, i32
  }
}

</mosaic_0001>

<llo_original>
// kernel: conv1dnet_forward.1
$region0: #{conv1dnet_forward.1}
  #allocation0 [shape = 'u32[]', space=smem, size = 0x4, offset = 0x4, fixed_abs, tag = 'smem constant byte address 0x4 - core index']
  #allocation1 [shape = 'u32[144,128]{1,0:T(1,128)}', space=vmem, size = 0x12000, scoped, tag = 'internal scratch']
  #allocation2 [shape = 'f32[1,1]{1,0:T(1,128)S(1)}', space=vmem, size = 0x200, scoped, tag = 'scoped memory for conv1dnet_forward.1']
  %s0 = inlined_call_operand.vmem [shape: f32[8,16], index: 0, kind: input, shape index: {}]
  %s1 = inlined_call_operand.vmem [shape: f32[16,192], index: 1, kind: input, shape index: {}]
  %s2 = inlined_call_operand.vmem [shape: f32[1,192], index: 2, kind: input, shape index: {}]
  %s3 = inlined_call_operand.vmem [shape: f32[192,50], index: 3, kind: input, shape index: {}]
  %s4 = inlined_call_operand.vmem [shape: f32[1,50], index: 4, kind: input, shape index: {}]
  %s5 = inlined_call_operand.vmem [shape: f32[1,50], index: 5, kind: input, shape index: {}]
  %s6 = inlined_call_operand.<no memory space> [shape: f32[1,1], index: 6, kind: input, shape index: {}]
  %s7 = inlined_call_operand.vmem [shape: f32[1,1,8], index: 7, kind: output, shape index: {}]
  %s8 = sld [smem:[#allocation0]]
  $region38: #{conv1dnet_forward.1} parent=0
    _
  %s10 = ssub.s32 1, %s8
  %s11 = scalar_select 0, %s10, %s8
  %v12 = vstv %s6
  %13 = vst [vmem:[#allocation2] sm:$0x1] %v12
  // Predicated region
  $region2: #{conv1dnet_forward.1} parent=0 // pred_check
    _
  $region3: #{conv1dnet_forward.1} parent=0 // pred_check_branch
    %15 = sbr.rel (0) target = $region5
  $region4: #{conv1dnet_forward.1} parent=0 // pred_region
    _
  $region5: #{conv1dnet_forward.1} parent=0 // pred_fallthru
    _
  // Predicated region
  $region6: #{conv1dnet_forward.1} parent=0 // pred_check
    _
  $region7: #{conv1dnet_forward.1} parent=0 // pred_check_branch
    %17 = sbr.rel (0) target = $region9
  $region8: #{conv1dnet_forward.1} parent=0 // pred_region
    _
  $region9: #{conv1dnet_forward.1} parent=0 // pred_fallthru
    _
  // Predicated region
  $region10: #{conv1dnet_forward.1} parent=0 // pred_check
    _
  $region11: #{conv1dnet_forward.1} parent=0 // pred_check_branch
    %19 = sbr.rel (0) target = $region13
  $region12: #{conv1dnet_forward.1} parent=0 // pred_region
    _
  $region13: #{conv1dnet_forward.1} parent=0 // pred_fallthru
    _
  // Predicated region
  $region14: #{conv1dnet_forward.1} parent=0 // pred_check
    _
  $region15: #{conv1dnet_forward.1} parent=0 // pred_check_branch
    %21 = sbr.rel (0) target = $region17
  $region16: #{conv1dnet_forward.1} parent=0 // pred_region
    _
  $region17: #{conv1dnet_forward.1} parent=0 // pred_fallthru
    _
  // Predicated region
  $region18: #{conv1dnet_forward.1} parent=0 // pred_check
    _
  $region19: #{conv1dnet_forward.1} parent=0 // pred_check_branch
    %23 = sbr.rel (0) target = $region21
  $region20: #{conv1dnet_forward.1} parent=0 // pred_region
    _
  $region21: #{conv1dnet_forward.1} parent=0 // pred_fallthru
    _
  // Predicated region
  $region22: #{conv1dnet_forward.1} parent=0 // pred_check
    _
  $region23: #{conv1dnet_forward.1} parent=0 // pred_check_branch
    %25 = sbr.rel (0) target = $region25
  $region24: #{conv1dnet_forward.1} parent=0 // pred_region
    _
  $region25: #{conv1dnet_forward.1} parent=0 // pred_fallthru
    _
  // Predicated region
  $region26: #{conv1dnet_forward.1} parent=0 // pred_check
    _
  $region27: #{conv1dnet_forward.1} parent=0 // pred_check_branch
    %27 = sbr.rel (0) target = $region29
  $region28: #{conv1dnet_forward.1} parent=0 // pred_region
    _
  $region29: #{conv1dnet_forward.1} parent=0 // pred_fallthru
    _
  %v28 = vld [vmem:[%s0] sm:$0xff]
  %v29 = vld [vmem:[%s1] sm:$0xff]
  %v30 = vld [vmem:[%s1 + $0x8] sm:$0xff]
  %v31 = vld [vmem:[%s1 + $0x10] sm:$0xff]
  %v32 = vld [vmem:[%s1 + $0x18] sm:$0xff]
  %v33 = vld [vmem:[%s2] sm:$0x3]
  %v35 = vlaneseq
  %v36 = vshrl.u32 %v35, 7
  %v37 = vsub.s32 0, %v36
  %v38 = vrot.slane %v33, %v37
  %v39 = vlaneseq
  %v40 = vshrl.u32 %v39, 7
  %v41 = vsub.s32 1, %v40
  %v42 = vrot.slane %v33, %v41
  %vm45 = vcmask 130048
  %v47 = vsel %vm45, %v28, 0
  %49 = vmatprep.subr.mxu0 0.0
  %50 = vmatpush1.msra.mxu0 0.0
  %51 = vmatprep.subr.mxu0 0.0
  %52 = vmatpush1.msra.mxu0 0.0
  %53 = vmatprep.subr.mxu0 0.0
  %54 = vmatpush1.msra.mxu0 0.0
  %55 = vmatprep.subr.mxu0 0.0
  %56 = vmatpush1.msra.mxu0 0.0
  %57 = vmatprep.subr.mxu0 0.0
  %58 = vmatpush1.msra.mxu0 0.0
  %59 = vmatprep.subr.mxu0 0.0
  %60 = vmatpush1.msra.mxu0 0.0
  %61 = vmatprep.subr.mxu0 0.0
  %62 = vmatpush1.msra.mxu0 0.0
  %63 = vmatprep.subr.mxu0 0.0
  %64 = vmatpush1.msra.mxu0 0.0
  %65 = vmatprep.subr.mxu0 0.0
  %66 = vmatpush1.msra.mxu0 0.0
  %67 = vmatprep.subr.mxu0 0.0
  %68 = vmatpush1.msra.mxu0 0.0
  %69 = vmatprep.subr.mxu0 0.0
  %70 = vmatpush1.msra.mxu0 0.0
  %71 = vmatprep.subr.mxu0 0.0
  %72 = vmatpush1.msra.mxu0 0.0
  %73 = vmatprep.subr.mxu0 0.0
  %74 = vmatpush1.msra.mxu0 0.0
  %75 = vmatprep.subr.mxu0 0.0
  %76 = vmatpush1.msra.mxu0 0.0
  %77 = vmatprep.subr.mxu0 %v32
  %78 = vmatpush1.msra.mxu0 %v31
  %79 = vmatprep.subr.mxu0 %v30
  %80 = vmatpush1.msra.mxu0 %v29
  %81 = vmatprep.subr.mxu0 0.0
  %82 = vmatpush2.msra.mxu0 0.0
  %83 = vmatprep.subr.mxu0 0.0
  %84 = vmatpush2.msra.mxu0 0.0
  %85 = vmatprep.subr.mxu0 0.0
  %86 = vmatpush2.msra.mxu0 0.0
  %87 = vmatprep.subr.mxu0 0.0
  %88 = vmatpush2.msra.mxu0 0.0
  %89 = vmatprep.subr.mxu0 0.0
  %90 = vmatpush2.msra.mxu0 0.0
  %91 = vmatprep.subr.mxu0 0.0
  %92 = vmatpush2.msra.mxu0 0.0
  %93 = vmatprep.subr.mxu0 0.0
  %94 = vmatpush2.msra.mxu0 0.0
  %95 = vmatprep.subr.mxu0 0.0
  %96 = vmatpush2.msra.mxu0 0.0
  %97 = vmatprep.subr.mxu0 0.0
  %98 = vmatpush2.msra.mxu0 0.0
  %99 = vmatprep.subr.mxu0 0.0
  %100 = vmatpush2.msra.mxu0 0.0
  %101 = vmatprep.subr.mxu0 0.0
  %102 = vmatpush2.msra.mxu0 0.0
  %103 = vmatprep.subr.mxu0 0.0
  %104 = vmatpush2.msra.mxu0 0.0
  %105 = vmatprep.subr.mxu0 0.0
  %106 = vmatpush2.msra.mxu0 0.0
  %107 = vmatprep.subr.mxu0 0.0
  %108 = vmatpush2.msra.mxu0 0.0
  %109 = vmatprep.subr.mxu0 0.0
  %110 = vmatpush2.msra.mxu0 0.0
  %111 = vmatprep.subr.mxu0 0.0
  %112 = vmatpush2.msra.mxu0 0.0
  %113 = vmatprep.mubr.f32.mxu0 0.0
  %114 = vmatmul.mubr.f32.gmra.mxu0 %v47
  %v115 = vpop.f32.mrf.mxu0
  %v116 = vadd.f32 %v38, %v115
  %v117 = vpop.f32.mrf.mxu0
  %v118 = vadd.f32 %v42, %v117
  %119 = vdwg.mxu0
  %v120 = vmax.f32 %v116, 0.0
  %v121 = vmax.f32 %v118, 0.0
  %v122 = vld [vmem:[%s3] sm:$0xff]
  %v123 = vld [vmem:[%s3 + $0x8] sm:$0xff]
  %v124 = vld [vmem:[%s3 + $0x10] sm:$0xff]
  %v125 = vld [vmem:[%s3 + $0x18] sm:$0xff]
  %v126 = vld [vmem:[%s3 + $0x20] sm:$0xff]
  %v127 = vld [vmem:[%s3 + $0x28] sm:$0xff]
  %v128 = vld [vmem:[%s3 + $0x30] sm:$0xff]
  %v129 = vld [vmem:[%s3 + $0x38] sm:$0xff]
  %v130 = vld [vmem:[%s3 + $0x40] sm:$0xff]
  %v131 = vld [vmem:[%s3 + $0x48] sm:$0xff]
  %v132 = vld [vmem:[%s3 + $0x50] sm:$0xff]
  %v133 = vld [vmem:[%s3 + $0x58] sm:$0xff]
  %v134 = vld [vmem:[%s3 + $0x60] sm:$0xff]
  %v135 = vld [vmem:[%s3 + $0x68] sm:$0xff]
  %v136 = vld [vmem:[%s3 + $0x70] sm:$0xff]
  %v137 = vld [vmem:[%s3 + $0x78] sm:$0xff]
  %v138 = vld [vmem:[%s3 + $0x80] sm:$0xff]
  %v139 = vld [vmem:[%s3 + $0x88] sm:$0xff]
  %v140 = vld [vmem:[%s3 + $0x90] sm:$0xff]
  %v141 = vld [vmem:[%s3 + $0x98] sm:$0xff]
  %v142 = vld [vmem:[%s3 + $0xa0] sm:$0xff]
  %v143 = vld [vmem:[%s3 + $0xa8] sm:$0xff]
  %v144 = vld [vmem:[%s3 + $0xb0] sm:$0xff]
  %v145 = vld [vmem:[%s3 + $0xb8] sm:$0xff]
  %v146 = vld [vmem:[%s4] sm:$0x1]
  %v148 = vlaneseq
  %v149 = vshrl.u32 %v148, 7
  %v150 = vsub.s32 0, %v149
  %v151 = vrot.slane %v146, %v150
  %vm153 = vcmask 523264
  %v155 = vsel %vm153, %v121, 0
  %157 = vmatprep.subr.mxu0 0.0
  %158 = vmatpush1.msra.mxu0 %v137
  %159 = vmatprep.subr.mxu0 0.0
  %160 = vmatpush1.msra.mxu0 %v136
  %161 = vmatprep.subr.mxu0 0.0
  %162 = vmatpush1.msra.mxu0 %v135
  %163 = vmatprep.subr.mxu0 0.0
  %164 = vmatpush1.msra.mxu0 %v134
  %165 = vmatprep.subr.mxu0 0.0
  %166 = vmatpush1.msra.mxu0 %v133
  %167 = vmatprep.subr.mxu0 0.0
  %168 = vmatpush1.msra.mxu0 %v132
  %169 = vmatprep.subr.mxu0 0.0
  %170 = vmatpush1.msra.mxu0 %v131
  %171 = vmatprep.subr.mxu0 0.0
  %172 = vmatpush1.msra.mxu0 %v130
  %173 = vmatprep.subr.mxu0 0.0
  %174 = vmatpush1.msra.mxu0 %v129
  %175 = vmatprep.subr.mxu0 0.0
  %176 = vmatpush1.msra.mxu0 %v128
  %177 = vmatprep.subr.mxu0 0.0
  %178 = vmatpush1.msra.mxu0 %v127
  %179 = vmatprep.subr.mxu0 0.0
  %180 = vmatpush1.msra.mxu0 %v126
  %181 = vmatprep.subr.mxu0 0.0
  %182 = vmatpush1.msra.mxu0 %v125
  %183 = vmatprep.subr.mxu0 0.0
  %184 = vmatpush1.msra.mxu0 %v124
  %185 = vmatprep.subr.mxu0 0.0
  %186 = vmatpush1.msra.mxu0 %v123
  %187 = vmatprep.subr.mxu0 0.0
  %188 = vmatpush1.msra.mxu0 %v122
  %189 = vmatprep.subr.mxu0 0.0
  %190 = vmatpush2.msra.mxu0 0.0
  %191 = vmatprep.subr.mxu0 0.0
  %192 = vmatpush2.msra.mxu0 0.0
  %193 = vmatprep.subr.mxu0 0.0
  %194 = vmatpush2.msra.mxu0 0.0
  %195 = vmatprep.subr.mxu0 0.0
  %196 = vmatpush2.msra.mxu0 0.0
  %197 = vmatprep.subr.mxu0 0.0
  %198 = vmatpush2.msra.mxu0 0.0
  %199 = vmatprep.subr.mxu0 0.0
  %200 = vmatpush2.msra.mxu0 0.0
  %201 = vmatprep.subr.mxu0 0.0
  %202 = vmatpush2.msra.mxu0 0.0
  %203 = vmatprep.subr.mxu0 0.0
  %204 = vmatpush2.msra.mxu0 0.0
  %205 = vmatprep.subr.mxu0 0.0
  %206 = vmatpush2.msra.mxu0 %v145
  %207 = vmatprep.subr.mxu0 0.0
  %208 = vmatpush2.msra.mxu0 %v144
  %209 = vmatprep.subr.mxu0 0.0
  %210 = vmatpush2.msra.mxu0 %v143
  %211 = vmatprep.subr.mxu0 0.0
  %212 = vmatpush2.msra.mxu0 %v142
  %213 = vmatprep.subr.mxu0 0.0
  %214 = vmatpush2.msra.mxu0 %v141
  %215 = vmatprep.subr.mxu0 0.0
  %216 = vmatpush2.msra.mxu0 %v140
  %217 = vmatprep.subr.mxu0 0.0
  %218 = vmatpush2.msra.mxu0 %v139
  %219 = vmatprep.subr.mxu0 0.0
  %220 = vmatpush2.msra.mxu0 %v138
  %221 = vmatprep.mubr.f32.mxu0 %v155
  %222 = vmatmul.mubr.f32.gmra.mxu0 %v120
  %v223 = vpop.f32.mrf.mxu0
  %v224 = vadd.f32 %v151, %v223
  %v225 = vpop.f32.mrf.mxu0
  %226 = vdwg.mxu0
  %v227 = vmax.f32 %v224, 0.0
  %v228 = vld [vmem:[%s5] sm:$0x1]
  %v229 = vld [vmem:[#allocation2] sm:$0x1]
  %231 = vset.pattern.permute.xlu0 0
  %232 = vperm.xlu0 %231, %v229
  %v233 = vpop.permute.xlu0 %232
  %v235 = vlaneseq
  %v236 = vshrl.u32 %v235, 7
  %v237 = vsub.s32 0, %v236
  %v238 = vrot.slane %v233, %v237
  %vm239 = vcmask 408576
  %v241 = vsel %vm239, %v228, 0
  %v244 = vsel %vm239, %v227, 0
  %246 = vmatprep.subr.mxu0 0.0
  %247 = vmatpush1.xpose.msra.mxu0 0.0
  %248 = vmatprep.subr.mxu0 0.0
  %249 = vmatpush1.xpose.msra.mxu0 0.0
  %250 = vmatprep.subr.mxu0 0.0
  %251 = vmatpush1.xpose.msra.mxu0 0.0
  %252 = vmatprep.subr.mxu0 0.0
  %253 = vmatpush1.xpose.msra.mxu0 0.0
  %254 = vmatprep.subr.mxu0 0.0
  %255 = vmatpush1.xpose.msra.mxu0 0.0
  %256 = vmatprep.subr.mxu0 0.0
  %257 = vmatpush1.xpose.msra.mxu0 0.0
  %258 = vmatprep.subr.mxu0 0.0
  %259 = vmatpush1.xpose.msra.mxu0 0.0
  %260 = vmatprep.subr.mxu0 0.0
  %261 = vmatpush1.xpose.msra.mxu0 0.0
  %262 = vmatprep.subr.mxu0 0.0
  %263 = vmatpush1.xpose.msra.mxu0 0.0
  %264 = vmatprep.subr.mxu0 0.0
  %265 = vmatpush1.xpose.msra.mxu0 0.0
  %266 = vmatprep.subr.mxu0 0.0
  %267 = vmatpush1.xpose.msra.mxu0 0.0
  %268 = vmatprep.subr.mxu0 0.0
  %269 = vmatpush1.xpose.msra.mxu0 0.0
  %270 = vmatprep.subr.mxu0 0.0
  %271 = vmatpush1.xpose.msra.mxu0 0.0
  %272 = vmatprep.subr.mxu0 0.0
  %273 = vmatpush1.xpose.msra.mxu0 0.0
  %274 = vmatprep.subr.mxu0 0.0
  %275 = vmatpush1.xpose.msra.mxu0 0.0
  %276 = vmatprep.subr.mxu0 0.0
  %277 = vmatpush1.xpose.msra.mxu0 %v244
  %278 = vmatprep.subr.mxu0 0.0
  %279 = vmatpush2.xpose.msra.mxu0 0.0
  %280 = vmatprep.subr.mxu0 0.0
  %281 = vmatpush2.xpose.msra.mxu0 0.0
  %282 = vmatprep.subr.mxu0 0.0
  %283 = vmatpush2.xpose.msra.mxu0 0.0
  %284 = vmatprep.subr.mxu0 0.0
  %285 = vmatpush2.xpose.msra.mxu0 0.0
  %286 = vmatprep.subr.mxu0 0.0
  %287 = vmatpush2.xpose.msra.mxu0 0.0
  %288 = vmatprep.subr.mxu0 0.0
  %289 = vmatpush2.xpose.msra.mxu0 0.0
  %290 = vmatprep.subr.mxu0 0.0
  %291 = vmatpush2.xpose.msra.mxu0 0.0
  %292 = vmatprep.subr.mxu0 0.0
  %293 = vmatpush2.xpose.msra.mxu0 0.0
  %294 = vmatprep.subr.mxu0 0.0
  %295 = vmatpush2.xpose.msra.mxu0 0.0
  %296 = vmatprep.subr.mxu0 0.0
  %297 = vmatpush2.xpose.msra.mxu0 0.0
  %298 = vmatprep.subr.mxu0 0.0
  %299 = vmatpush2.xpose.msra.mxu0 0.0
  %300 = vmatprep.subr.mxu0 0.0
  %301 = vmatpush2.xpose.msra.mxu0 0.0
  %302 = vmatprep.subr.mxu0 0.0
  %303 = vmatpush2.xpose.msra.mxu0 0.0
  %304 = vmatprep.subr.mxu0 0.0
  %305 = vmatpush2.xpose.msra.mxu0 0.0
  %306 = vmatprep.subr.mxu0 0.0
  %307 = vmatpush2.xpose.msra.mxu0 0.0
  %308 = vmatprep.subr.mxu0 0.0
  %309 = vmatpush2.xpose.msra.mxu0 0.0
  %310 = vmatprep.mubr.f32.mxu0 0.0
  %311 = vmatmul.mubr.f32.gmra.mxu0 %v241
  %v312 = vpop.f32.mrf.mxu0
  %v313 = vadd.f32 %v238, %v312
  %v314 = vpop.f32.mrf.mxu0
  %315 = vdwg.mxu0
  %vm316 = vcmask 57344
  %317 = vst.msk [vmem:[%s7] sm:$0x1] %vm316, %v313
  // Predicated region
  $region30: #{conv1dnet_forward.1} parent=0 // pred_check
    _
  $region31: #{conv1dnet_forward.1} parent=0 // pred_check_branch
    %319 = sbr.rel (0) target = $region33
  $region32: #{conv1dnet_forward.1} parent=0 // pred_region
    _
  $region33: #{conv1dnet_forward.1} parent=0 // pred_fallthru
    _
  // Predicated region
  $region34: #{conv1dnet_forward.1} parent=0 // pred_check
    _
  $region35: #{conv1dnet_forward.1} parent=0 // pred_check_branch
    %321 = sbr.rel (0) target = $region37
  $region36: #{conv1dnet_forward.1} parent=0 // pred_region
    _
  $region37: #{conv1dnet_forward.1} parent=0 // pred_fallthru
    _

</llo_original>
